<compile_context>
chip_gen: v6e
topology: v6e:2x2x1
jax: 0.10.0
libtpu: 0.0.40
codegen_flags: <defaults>
</compile_context>

<pallas_src>
import math
import functools

import jax
import jax.numpy as jnp
from jax.experimental import pallas as pl
from jax.experimental.pallas import tpu as pltpu

_LANE = 128
_BF16_SUBLANE = 16  # bf16 sublane-tile height


def _round_up(x, m):
    return ((x + m - 1) // m) * m


# --------------------------------------------------------------------------
# Parameter packing: one flat [rows, cols] bf16 slab.
# Torch-native [out, in] weight blocks and [out, 1] bias columns, each block
# starting on a 16-row (bf16 sublane-tile) boundary so static slices never
# straddle tiles.
# --------------------------------------------------------------------------
def pack_params(params, state_dim, action_dim, hidden_size):
    S, A, H = state_dim, action_dim, hidden_size
    blocks = (("w1", (H, S)), ("w2", (H, H)), ("w3", (H, H)), ("w4", (2 * A, H)),
              ("b1", (H, 1)), ("b2", (H, 1)), ("b3", (H, 1)), ("b4", (2 * A, 1)))

    layout = {}
    row = 0
    for name, (r, _) in blocks:
        layout[name] = row
        row += _round_up(r, _BF16_SUBLANE)
    rows, cols = row, max(S, H)

    buf = jnp.zeros((rows, cols), jnp.bfloat16)
    for name, (r, c) in blocks:
        mat = params[name].reshape(r, c).astype(jnp.bfloat16)
        buf = jax.lax.dynamic_update_slice(buf, mat, (layout[name], 0))
    return buf, layout, rows, cols


# --------------------------------------------------------------------------
# Kernel (feature-major: every activation is [feat, TB] with batch on lanes)
# --------------------------------------------------------------------------
def _policy_kernel(x_ref, p_ref, eps_ref, out_ref, *,
                   state_dim, action_dim, hidden_size, layout, get_logprob):
    S, A, H = state_dim, action_dim, hidden_size
    L = layout

    # Static-offset views into the single VMEM-resident bf16 parameter slab.
    w1 = p_ref[L["w1"]:L["w1"] + H, 0:S]
    w2 = p_ref[L["w2"]:L["w2"] + H, 0:H]
    w3 = p_ref[L["w3"]:L["w3"] + H, 0:H]
    w4 = p_ref[L["w4"]:L["w4"] + 2 * A, 0:H]
    b1 = p_ref[L["b1"]:L["b1"] + H, 0:1].astype(jnp.float32)
    b2 = p_ref[L["b2"]:L["b2"] + H, 0:1].astype(jnp.float32)
    b3 = p_ref[L["b3"]:L["b3"] + H, 0:1].astype(jnp.float32)
    b4 = p_ref[L["b4"]:L["b4"] + 2 * A, 0:1].astype(jnp.float32)

    x = x_ref[...]                                        # [S, TB] bf16

    # MLPNetwork: relu(W @ h + b) x3, bf16 MXU operands, f32 accumulation.
    def layer(w, h, b):
        z = jnp.dot(w, h, preferred_element_type=jnp.float32) + b
        return jnp.maximum(z, 0.0).astype(jnp.bfloat16)

    h = layer(w1, x, b1)                                  # [H, TB]
    h = layer(w2, h, b2)                                  # [H, TB]
    h = layer(w3, h, b3)                                  # [H, TB]

    # Merged head: one matmul -> [2A, TB]; split mu / logstd along sublanes.
    head = jnp.dot(w4, h, preferred_element_type=jnp.float32) + b4
    mu = head[:A, :]                                      # [A, TB]
    logstd = jnp.clip(head[A:, :], -20.0, 2.0)            # [A, TB]

    # compute_action: reparameterized sample through TanhTransform (f32).
    eps = eps_ref[...]                                    # [A, TB] f32
    std = jnp.exp(logstd)
    pre = mu + std * eps                                  # Normal(mu, std).rsample()
    action = jnp.tanh(pre)
    mean = jnp.tanh(mu)

    # Direct sub-row stores into the fused lane-dense output slab.
    out_ref[0:A, :] = action.astype(out_ref.dtype)
    out_ref[A:2 * A, :] = mean.astype(out_ref.dtype)

    if get_logprob:
        # TransformedDistribution(Normal(mu, std), TanhTransform).log_prob:
        #   Normal.log_prob(pre) - log|d tanh / d pre|
        #   Normal.log_prob(pre) = -0.5*eps^2 - logstd - 0.5*log(2*pi)
        #   log|d tanh/dx|       = 2*(log 2 - x - softplus(-2x))   (stable)
        normal_lp = -0.5 * eps * eps - logstd - 0.5 * math.log(2.0 * math.pi)
        log_det = 2.0 * (math.log(2.0) - pre - jax.nn.softplus(-2.0 * pre))
        logprob = jnp.sum(normal_lp - log_det, axis=0, keepdims=True)  # [1, TB]
        out_ref[2 * A:2 * A + 1, :] = logprob.astype(out_ref.dtype)


# --------------------------------------------------------------------------
# Wrapper
# --------------------------------------------------------------------------
def policy_forward(params, x, eps, state_dim, action_dim, hidden_size,
                   get_logprob=False, batch_tile=4096):
    """Pallas implementation of Policy.forward(x). Returns (action, logprob, mean)."""
    B = x.shape[0]
    S, A, H = state_dim, action_dim, hidden_size
    packed, layout, rows, cols = pack_params(params, S, A, H)

    # Lane-aligned batch tiles with minimal padding; force >= 2 grid steps for
    # large batches so the "parallel" batch axis can use both v7x TensorCores.
    n_tiles = max(pl.cdiv(B, batch_tile), 2 if B >= 2 * _LANE else 1)
    tb = _round_up(pl.cdiv(B, n_tiles), _LANE)
    b_pad = n_tiles * tb

    # Feature-major inputs: batch on the lane axis. x in bf16 (MXU operand,
    # halves its HBM bytes); eps stays f32 (used directly in the f32 epilogue).
    xt = jnp.transpose(x).astype(jnp.bfloat16)            # [S, B]
    et = jnp.transpose(eps).astype(jnp.float32)           # [A, B]
    if b_pad != B:
        xt = jnp.pad(xt, ((0, 0), (0, b_pad - B)))
        et = jnp.pad(et, ((0, 0), (0, b_pad - B)))

    out_rows = 2 * A + (1 if get_logprob else 0)

    kernel = functools.partial(
        _policy_kernel, state_dim=S, action_dim=A, hidden_size=H,
        layout=layout, get_logprob=get_logprob)

    cost = pl.CostEstimate(
        flops=2 * b_pad * (S * H + 2 * H * H + H * 2 * A),
        transcendentals=b_pad * A * (5 if get_logprob else 3),
        bytes_accessed=(S * b_pad * 2 + A * b_pad * 4
                        + out_rows * b_pad * 4 + rows * cols * 2))

    fused = pl.pallas_call(
        kernel,
        out_shape=jax.ShapeDtypeStruct((out_rows, b_pad), jnp.float32),
        grid=(n_tiles,),
        in_specs=[
            pl.BlockSpec((S, tb), lambda i: (0, i)),        # x: batch-tiled
            pl.BlockSpec((rows, cols), lambda i: (0, 0)),   # params: VMEM-resident
            pl.BlockSpec((A, tb), lambda i: (0, i)),        # eps: batch-tiled
        ],
        out_specs=pl.BlockSpec((out_rows, tb), lambda i: (0, i)),
        compiler_params=pltpu.CompilerParams(
            dimension_semantics=("parallel",)),
        cost_estimate=cost,
    )(xt, packed, et)

    action = jnp.transpose(fused[0:A, :B])                  # [B, A]
    mean = jnp.transpose(fused[A:2 * A, :B])                 # [B, A]
    logprob = jnp.transpose(fused[2 * A:, :B]) if get_logprob else None  # [B, 1]
    return action, logprob, mean


# --------------------------------------------------------------------------
# Init + reference
# --------------------------------------------------------------------------
def init_params(key, state_dim, action_dim, hidden_size):
    """nn.Linear-style init, torch-native layouts: w [out, in], b [out]."""
    dims = [(hidden_size, state_dim),
            (hidden_size, hidden_size),
            (hidden_size, hidden_size),
            (2 * action_dim, hidden_size)]
    params = {}
    for i, (fan_out, fan_in) in enumerate(dims, start=1):
        key, kw, kb = jax.random.split(key, 3)
        bound = 1.0 / math.sqrt(fan_in)
        params[f"w{i}"] = jax.random.uniform(
            kw, (fan_out, fan_in), jnp.float32, minval=-bound, maxval=bound)
        params[f"b{i}"] = jax.random.uniform(
            kb, (fan_out,), jnp.float32, minval=-bound, maxval=bound)
    return params


def ref_forward(params, x, eps, action_dim, matmul_dtype=jnp.float32):
    """Pure-JAX batch-major reference (PyTorch semantics).
    matmul_dtype=bf16 mirrors the kernel's MXU precision exactly."""
    A = action_dim

    def lin(h, w, b):
        out = jnp.dot(h.astype(matmul_dtype), w.astype(matmul_dtype).T,
                      preferred_element_type=jnp.float32)
        return out + b.astype(matmul_dtype).astype(jnp.float32)

    h = jnp.maximum(lin(x, params["w1"], params["b1"]), 0.0)
    h = jnp.maximum(lin(h, params["w2"], params["b2"]), 0.0)
    h = jnp.maximum(lin(h, params["w3"], params["b3"]), 0.0)
    out = lin(h, params["w4"], params["b4"])
    mu, logstd = out[:, :A], out[:, A:]
    logstd = jnp.clip(logstd, -20.0, 2.0)
    std = jnp.exp(logstd)
    pre = mu + std * eps
    act = jnp.tanh(pre)
    nlp = -0.5 * eps * eps - logstd - 0.5 * math.log(2.0 * math.pi)
    ldet = 2.0 * (math.log(2.0) - pre - jax.nn.softplus(-2.0 * pre))
    lp = jnp.sum(nlp - ldet, axis=-1, keepdims=True)
    return act, lp, jnp.tanh(mu)


if __name__ == "__main__":
    B, STATE_DIM, ACTION_DIM, HIDDEN = 8, 16, 4, 32

    key = jax.random.PRNGKey(0)
    key, kx, keps, kp = jax.random.split(key, 4)

    x = jax.random.normal(kx, (B, STATE_DIM), jnp.float32)
    eps = jax.random.normal(keps, (B, ACTION_DIM), jnp.float32)  # rsample noise
    params = init_params(kp, STATE_DIM, ACTION_DIM, HIDDEN)

    # get_logprob=True path
    action, logprob, mean = policy_forward(
        params, x, eps, STATE_DIM, ACTION_DIM, HIDDEN, get_logprob=True)
    jax.block_until_ready((action, logprob, mean))

    # get_logprob=False path (log-prob epilogue compiled out entirely)
    a2, lp2, m2 = policy_forward(
        params, x, eps, STATE_DIM, ACTION_DIM, HIDDEN, get_logprob=False)
    jax.block_until_ready((a2, m2))
    assert lp2 is None, "logprob should be None when get_logprob=False"

    # Tight check vs a reference that mirrors the kernel's bf16 MXU precision.
    ra, rl, rm = ref_forward(params, x, eps, ACTION_DIM, matmul_dtype=jnp.bfloat16)
    assert jnp.allclose(action, ra, atol=5e-3), "action mismatch (bf16 ref)"
    assert jnp.allclose(mean, rm, atol=5e-3), "mean mismatch (bf16 ref)"
    assert jnp.allclose(logprob, rl, atol=2e-2), "logprob mismatch (bf16 ref)"
    assert jnp.allclose(a2, ra, atol=5e-3), "action mismatch (no-logprob path)"
    assert jnp.allclose(m2, rm, atol=5e-3), "mean mismatch (no-logprob path)"

    # Loose check vs full-f32 reference (exact PyTorch semantics; bf16 matmuls
    # introduce ~1e-3..1e-2 level differences).
    fa, fl, fm = ref_forward(params, x, eps, ACTION_DIM, matmul_dtype=jnp.float32)
    assert jnp.allclose(action, fa, atol=5e-2), "action mismatch (f32 ref)"
    assert jnp.allclose(mean, fm, atol=5e-2), "mean mismatch (f32 ref)"
    assert jnp.allclose(logprob, fl, atol=2.5e-1), "logprob mismatch (f32 ref)"

    print("KERNEL_OK")
</pallas_src>

<mosaic_0001>
module attributes {stable_mosaic.version = 11 : i64} {
  func.func @_policy_kernel(%arg0: i32, %arg1: memref<16x128xbf16, #tpu.memory_space<vmem>>, %arg2: memref<224x32xbf16, #tpu.memory_space<vmem>>, %arg3: memref<4x128xf32, #tpu.memory_space<vmem>>, %arg4: memref<9x128xf32, #tpu.memory_space<vmem>>) attributes {dimension_semantics = [#tpu.dimension_semantics<parallel>], iteration_bounds = array<i64: 1>, scalar_prefetch = 0 : i64, scratch_operands = 0 : i64, tpu.core_type = #tpu.core_type<tc>, window_params = [{transform_indices = @transform_0, window_bounds = array<i64: 16, 128>}, {pipeline_mode = #tpu.pipeline_mode<synchronous>, transform_indices = @transform_1, window_bounds = array<i64: 224, 32>}, {transform_indices = @transform_2, window_bounds = array<i64: 4, 128>}, {transform_indices = @transform_3, window_bounds = array<i64: 9, 128>}]} {
    %c0 = arith.constant 0 : index
    %c0_0 = arith.constant 0 : index
    %0 = vector.load %arg2[%c0, %c0_0] : memref<224x32xbf16, #tpu.memory_space<vmem>>, vector<32x16xbf16>
    %c32 = arith.constant 32 : index
    %c0_1 = arith.constant 0 : index
    %1 = vector.load %arg2[%c32, %c0_1] : memref<224x32xbf16, #tpu.memory_space<vmem>>, vector<32x32xbf16>
    %c64 = arith.constant 64 : index
    %c0_2 = arith.constant 0 : index
    %2 = vector.load %arg2[%c64, %c0_2] : memref<224x32xbf16, #tpu.memory_space<vmem>>, vector<32x32xbf16>
    %c96 = arith.constant 96 : index
    %c0_3 = arith.constant 0 : index
    %3 = vector.load %arg2[%c96, %c0_3] : memref<224x32xbf16, #tpu.memory_space<vmem>>, vector<8x32xbf16>
    %c112 = arith.constant 112 : index
    %c0_4 = arith.constant 0 : index
    %4 = vector.load %arg2[%c112, %c0_4] : memref<224x32xbf16, #tpu.memory_space<vmem>>, vector<32x1xbf16>
    %5 = arith.extf %4 : vector<32x1xbf16> to vector<32x1xf32>
    %c144 = arith.constant 144 : index
    %c0_5 = arith.constant 0 : index
    %6 = vector.load %arg2[%c144, %c0_5] : memref<224x32xbf16, #tpu.memory_space<vmem>>, vector<32x1xbf16>
    %7 = arith.extf %6 : vector<32x1xbf16> to vector<32x1xf32>
    %c176 = arith.constant 176 : index
    %c0_6 = arith.constant 0 : index
    %8 = vector.load %arg2[%c176, %c0_6] : memref<224x32xbf16, #tpu.memory_space<vmem>>, vector<32x1xbf16>
    %9 = arith.extf %8 : vector<32x1xbf16> to vector<32x1xf32>
    %c208 = arith.constant 208 : index
    %c0_7 = arith.constant 0 : index
    %10 = vector.load %arg2[%c208, %c0_7] : memref<224x32xbf16, #tpu.memory_space<vmem>>, vector<8x1xbf16>
    %11 = arith.extf %10 : vector<8x1xbf16> to vector<8x1xf32>
    %c0_8 = arith.constant 0 : index
    %c0_9 = arith.constant 0 : index
    %12 = vector.load %arg1[%c0_8, %c0_9] : memref<16x128xbf16, #tpu.memory_space<vmem>>, vector<16x128xbf16>
    %cst = arith.constant dense<0.000000e+00> : vector<32x128xf32>
    %13 = tpu.matmul %0, %12, %cst {dimension_numbers = #tpu.dot_dimension_numbers<[1], [0], [0], [1], [0, 0, 1, 1], [], []>} : vector<32x16xbf16>, vector<16x128xbf16>, vector<32x128xf32> -> vector<32x128xf32>
    %14 = vector.broadcast %5 : vector<32x1xf32> to vector<32x128xf32>
    %15 = arith.addf %13, %14 : vector<32x128xf32>
    %cst_10 = arith.constant 0.000000e+00 : f32
    %16 = vector.broadcast %cst_10 : f32 to vector<32x128xf32>
    %17 = arith.maximumf %15, %16 : vector<32x128xf32>
    %18 = arith.truncf %17 : vector<32x128xf32> to vector<32x128xbf16>
    %cst_11 = arith.constant dense<0.000000e+00> : vector<32x128xf32>
    %19 = tpu.matmul %1, %18, %cst_11 {dimension_numbers = #tpu.dot_dimension_numbers<[1], [0], [0], [1], [0, 0, 1, 1], [], []>} : vector<32x32xbf16>, vector<32x128xbf16>, vector<32x128xf32> -> vector<32x128xf32>
    %20 = vector.broadcast %7 : vector<32x1xf32> to vector<32x128xf32>
    %21 = arith.addf %19, %20 : vector<32x128xf32>
    %cst_12 = arith.constant 0.000000e+00 : f32
    %22 = vector.broadcast %cst_12 : f32 to vector<32x128xf32>
    %23 = arith.maximumf %21, %22 : vector<32x128xf32>
    %24 = arith.truncf %23 : vector<32x128xf32> to vector<32x128xbf16>
    %cst_13 = arith.constant dense<0.000000e+00> : vector<32x128xf32>
    %25 = tpu.matmul %2, %24, %cst_13 {dimension_numbers = #tpu.dot_dimension_numbers<[1], [0], [0], [1], [0, 0, 1, 1], [], []>} : vector<32x32xbf16>, vector<32x128xbf16>, vector<32x128xf32> -> vector<32x128xf32>
    %26 = vector.broadcast %9 : vector<32x1xf32> to vector<32x128xf32>
    %27 = arith.addf %25, %26 : vector<32x128xf32>
    %cst_14 = arith.constant 0.000000e+00 : f32
    %28 = vector.broadcast %cst_14 : f32 to vector<32x128xf32>
    %29 = arith.maximumf %27, %28 : vector<32x128xf32>
    %30 = arith.truncf %29 : vector<32x128xf32> to vector<32x128xbf16>
    %cst_15 = arith.constant dense<0.000000e+00> : vector<8x128xf32>
    %31 = tpu.matmul %3, %30, %cst_15 {dimension_numbers = #tpu.dot_dimension_numbers<[1], [0], [0], [1], [0, 0, 1, 1], [], []>} : vector<8x32xbf16>, vector<32x128xbf16>, vector<8x128xf32> -> vector<8x128xf32>
    %32 = vector.broadcast %11 : vector<8x1xf32> to vector<8x128xf32>
    %33 = arith.addf %31, %32 : vector<8x128xf32>
    %34 = vector.extract_strided_slice %33 {offsets = [0, 0], sizes = [4, 128], strides = [1, 1]} : vector<8x128xf32> to vector<4x128xf32>
    %35 = vector.extract_strided_slice %33 {offsets = [4, 0], sizes = [4, 128], strides = [1, 1]} : vector<8x128xf32> to vector<4x128xf32>
    %cst_16 = arith.constant -2.000000e+01 : f32
    %cst_17 = arith.constant 2.000000e+00 : f32
    %36 = vector.broadcast %cst_16 : f32 to vector<4x128xf32>
    %37 = arith.maximumf %36, %35 : vector<4x128xf32>
    %38 = vector.broadcast %cst_17 : f32 to vector<4x128xf32>
    %39 = arith.minimumf %38, %37 : vector<4x128xf32>
    %c0_18 = arith.constant 0 : index
    %c0_19 = arith.constant 0 : index
    %40 = vector.load %arg3[%c0_18, %c0_19] : memref<4x128xf32, #tpu.memory_space<vmem>>, vector<4x128xf32>
    %41 = math.exp %39 : vector<4x128xf32>
    %42 = arith.mulf %41, %40 : vector<4x128xf32>
    %43 = arith.addf %34, %42 : vector<4x128xf32>
    %44 = math.tanh %43 : vector<4x128xf32>
    %45 = math.tanh %34 : vector<4x128xf32>
    %c0_20 = arith.constant 0 : index
    %c0_21 = arith.constant 0 : index
    %46 = vector.load %arg4[%c0_20, %c0_21] : memref<9x128xf32, #tpu.memory_space<vmem>>, vector<4x128xf32>
    tpu.vector_store %arg4[%c0_20, %c0_21], %44 {strides = array<i32>} : memref<9x128xf32, #tpu.memory_space<vmem>>, vector<4x128xf32>,
    %c4 = arith.constant 4 : index
    %c0_22 = arith.constant 0 : index
    %47 = vector.load %arg4[%c4, %c0_22] : memref<9x128xf32, #tpu.memory_space<vmem>>, vector<4x128xf32>
    tpu.vector_store %arg4[%c4, %c0_22], %45 {strides = array<i32>} : memref<9x128xf32, #tpu.memory_space<vmem>>, vector<4x128xf32>,
    %cst_23 = arith.constant -5.000000e-01 : f32
    %48 = vector.broadcast %cst_23 : f32 to vector<4x128xf32>
    %49 = arith.mulf %48, %40 : vector<4x128xf32>
    %50 = arith.mulf %49, %40 : vector<4x128xf32>
    %51 = arith.subf %50, %39 : vector<4x128xf32>
    %cst_24 = arith.constant 0.918938517 : f32
    %52 = vector.broadcast %cst_24 : f32 to vector<4x128xf32>
    %53 = arith.subf %51, %52 : vector<4x128xf32>
    %cst_25 = arith.constant 0.693147182 : f32
    %54 = vector.broadcast %cst_25 : f32 to vector<4x128xf32>
    %55 = arith.subf %54, %43 : vector<4x128xf32>
    %cst_26 = arith.constant -2.000000e+00 : f32
    %56 = vector.broadcast %cst_26 : f32 to vector<4x128xf32>
    %57 = arith.mulf %56, %43 : vector<4x128xf32>
    %cst_27 = arith.constant 0.000000e+00 : f32
    %58 = vector.broadcast %cst_27 : f32 to vector<4x128xf32>
    %59 = arith.maximumf %57, %58 : vector<4x128xf32>
    %60 = vector.broadcast %cst_27 : f32 to vector<4x128xf32>
    %61 = arith.subf %57, %60 : vector<4x128xf32>
    %62 = arith.cmpf one, %61, %61 : vector<4x128xf32>
    %63 = vector.broadcast %cst_27 : f32 to vector<4x128xf32>
    %64 = arith.addf %57, %63 : vector<4x128xf32>
    %65 = math.absf %61 : vector<4x128xf32>
    %cst_28 = arith.constant 0.000000e+00 : f32
    %66 = vector.broadcast %cst_28 : f32 to vector<4x128xf32>
    %67 = arith.subf %66, %65 : vector<4x128xf32>
    %68 = math.exp %67 : vector<4x128xf32>
    %69 = math.log1p %68 : vector<4x128xf32>
    %70 = arith.addf %59, %69 : vector<4x128xf32>
    %71 = arith.select %62, %64, %70 : vector<4x128xi1>, vector<4x128xf32>
    %72 = arith.subf %55, %71 : vector<4x128xf32>
    %cst_29 = arith.constant 2.000000e+00 : f32
    %73 = vector.broadcast %cst_29 : f32 to vector<4x128xf32>
    %74 = arith.mulf %73, %72 : vector<4x128xf32>
    %75 = arith.subf %53, %74 : vector<4x128xf32>
    %cst_30 = arith.constant dense<0.000000e+00> : vector<128xf32>
    %76 = vector.multi_reduction <add>, %75, %cst_30 [0] : vector<4x128xf32> to vector<128xf32>
    %77 = vector.shape_cast %76 : vector<128xf32> to vector<1x128xf32>
    %c8 = arith.constant 8 : index
    %c0_31 = arith.constant 0 : index
    %78 = vector.load %arg4[%c8, %c0_31] : memref<9x128xf32, #tpu.memory_space<vmem>>, vector<1x128xf32>
    tpu.vector_store %arg4[%c8, %c0_31], %77 {strides = array<i32>} : memref<9x128xf32, #tpu.memory_space<vmem>>, vector<1x128xf32>,
    return
  }
  func.func @transform_0(%arg0: i32) -> (i32, i32) {
    %c0_i32 = arith.constant 0 : i32
    %c0_i32_0 = arith.constant 0 : i32
    return %c0_i32, %arg0 : i32, i32
  }
  func.func @transform_1(%arg0: i32) -> (i32, i32) {
    %c0_i32 = arith.constant 0 : i32
    %c0_i32_0 = arith.constant 0 : i32
    %c0_i32_1 = arith.constant 0 : i32
    return %c0_i32, %c0_i32_0 : i32, i32
  }
  func.func @transform_2(%arg0: i32) -> (i32, i32) {
    %c0_i32 = arith.constant 0 : i32
    %c0_i32_0 = arith.constant 0 : i32
    return %c0_i32, %arg0 : i32, i32
  }
  func.func @transform_3(%arg0: i32) -> (i32, i32) {
    %c0_i32 = arith.constant 0 : i32
    %c0_i32_0 = arith.constant 0 : i32
    return %c0_i32, %arg0 : i32, i32
  }
}

</mosaic_0001>

<llo_original>
// kernel: tpu_custom_call.1
$region0: #{tpu_custom_call.1}
  #allocation0 [shape = 'u32[]', space=smem, size = 0x4, offset = 0x4, fixed_abs, tag = 'smem constant byte address 0x4 - core index']
  #allocation1 [shape = 'u32[144,128]{1,0:T(1,128)}', space=vmem, size = 0x12000, scoped, tag = 'internal scratch']
  %s0 = inlined_call_operand.vmem [shape: bf16[16,128], index: 0, kind: input, shape index: {}]
  %s1 = inlined_call_operand.vmem [shape: bf16[224,32], index: 1, kind: input, shape index: {}]
  %s2 = inlined_call_operand.vmem [shape: f32[4,128], index: 2, kind: input, shape index: {}]
  %s3 = inlined_call_operand.hbm [shape: f32[9,128], index: 3, kind: output, shape index: {}]
  %s4 = sld [smem:[#allocation0]]
  $region22: #{tpu_custom_call.1} parent=0
    _
  %s6 = ssub.s32 1, %s4
  %s7 = scalar_select 0, %s6, %s4
  $region1: #{tpu_custom_call.1} parent=0
    #allocation2 [shape = 'u8[8192]{0}', space=vmem, size = 0x2000, scoped, tag = 'output window, operand 0, single buffered']
    #allocation3 [shape = 's32[1]{0}', space=sflag, size = 0x4, scoped, tag = 'scoped memory for tpu_custom_call.1']
    %8 = vsyncpa [#allocation3], 0
    // Predicated region
    $region2: #{tpu_custom_call.1} parent=1 // pred_check
      _
    $region3: #{tpu_custom_call.1} parent=1 // pred_check_branch
      %10 = sbr.rel (0) target = $region5
    $region4: #{tpu_custom_call.1} parent=1 // pred_region
      _
    $region5: #{tpu_custom_call.1} parent=1 // pred_fallthru
      _
    // Predicated region
    $region6: #{tpu_custom_call.1} parent=1 // pred_check
      _
    $region7: #{tpu_custom_call.1} parent=1 // pred_check_branch
      %12 = sbr.rel (0) target = $region9
    $region8: #{tpu_custom_call.1} parent=1 // pred_region
      _
    $region9: #{tpu_custom_call.1} parent=1 // pred_fallthru
      _
    // Predicated region
    $region10: #{tpu_custom_call.1} parent=1 // pred_check
      _
    $region11: #{tpu_custom_call.1} parent=1 // pred_check_branch
      %14 = sbr.rel (0) target = $region13
    $region12: #{tpu_custom_call.1} parent=1 // pred_region
      _
    $region13: #{tpu_custom_call.1} parent=1 // pred_fallthru
      _
    %v16 = vld [vmem:[%s1] sm:$0xf]
    %v17 = vld [vmem:[%s1 + $0x4] sm:$0xf]
    %v18 = vld [vmem:[%s1 + $0x8] sm:$0xf]
    %v19 = vld [vmem:[%s1 + $0xc] sm:$0xf]
    %v20 = vld [vmem:[%s1 + $0x10] sm:$0xf]
    %v21 = vld [vmem:[%s1 + $0x14] sm:$0xf]
    %v22 = vld [vmem:[%s1 + $0x18] sm:$0xf]
    %v23 = vld [vmem:[%s1 + $0x1c] sm:$0xf]
    %v24 = vld [vmem:[%s1 + $0x20] sm:$0xf]
    %v25 = vld [vmem:[%s1 + $0x24] sm:$0xf]
    %v26 = vld [vmem:[%s1 + $0x28] sm:$0xf]
    %v27 = vld [vmem:[%s1 + $0x2c] sm:$0xf]
    %v28 = vld [vmem:[%s1 + $0x30] sm:$0xf]
    %v29 = vld [vmem:[%s1 + $0x38] sm:$0xf]
    %v30 = vld [vmem:[%s1 + $0x3c] sm:$0xf]
    %v31 = vld [vmem:[%s1 + $0x40] sm:$0xf]
    %v32 = vld [vmem:[%s1 + $0x44] sm:$0xf]
    %v33 = vunpack.c.l.bf16 %v29
    %v34 = vunpack.c.l.bf16 %v30
    %v35 = vunpack.c.l.bf16 %v31
    %v36 = vunpack.c.l.bf16 %v32
    %v37 = vld [vmem:[%s1 + $0x48] sm:$0xf]
    %v38 = vld [vmem:[%s1 + $0x4c] sm:$0xf]
    %v39 = vld [vmem:[%s1 + $0x50] sm:$0xf]
    %v40 = vld [vmem:[%s1 + $0x54] sm:$0xf]
    %v41 = vunpack.c.l.bf16 %v37
    %v42 = vunpack.c.l.bf16 %v38
    %v43 = vunpack.c.l.bf16 %v39
    %v44 = vunpack.c.l.bf16 %v40
    %v45 = vld [vmem:[%s1 + $0x58] sm:$0xf]
    %v46 = vld [vmem:[%s1 + $0x5c] sm:$0xf]
    %v47 = vld [vmem:[%s1 + $0x60] sm:$0xf]
    %v48 = vld [vmem:[%s1 + $0x64] sm:$0xf]
    %v49 = vunpack.c.l.bf16 %v45
    %v50 = vunpack.c.l.bf16 %v46
    %v51 = vunpack.c.l.bf16 %v47
    %v52 = vunpack.c.l.bf16 %v48
    %v53 = vld [vmem:[%s1 + $0x68] sm:$0xf]
    %v54 = vunpack.c.l.bf16 %v53
    %v55 = vld [vmem:[%s0] sm:$0xf]
    %v56 = vld [vmem:[%s0 + $0x4] sm:$0xf]
    %58 = vset.pattern.permute.xlu0 0
    %59 = vperm.xlu0 %58, %v33
    %v60 = vpop.permute.xlu0 %59
    %63 = vset.pattern.permute.xlu0 0
    %64 = vperm.xlu0 %63, %v34
    %v65 = vpop.permute.xlu0 %64
    %68 = vset.pattern.permute.xlu0 0
    %69 = vperm.xlu0 %68, %v35
    %v70 = vpop.permute.xlu0 %69
    %73 = vset.pattern.permute.xlu0 0
    %74 = vperm.xlu0 %73, %v36
    %v75 = vpop.permute.xlu0 %74
    %v81 = vunpack.c.l.b16 %v16
    %v82 = vunpack.c.l.b16 %v17
    %v83 = vunpack.c.l.b16 %v18
    %v84 = vunpack.c.l.b16 %v19
    %v85 = vpack.c.b16 %v82, %v81
    %v86 = vpack.c.b16 %v84, %v83
    %v89 = vunpack.c.l.b16 %v55
    %v90 = vunpack.c.l.b16 %v56
    %v91 = vpack.c.b16 %v90, %v89
    %vm93 = vcmask 130048
    %v95 = vsel %vm93, %v85, 0
    %v98 = vsel %vm93, %v86, 0
    %100 = vmatprep.subr.bf16.mxu0 0
    %101 = vmatpush1.bf16.msra.mxu0 0
    %102 = vmatprep.subr.bf16.mxu0 0
    %103 = vmatpush1.bf16.msra.mxu0 0
    %104 = vmatprep.subr.bf16.mxu0 0
    %105 = vmatpush1.bf16.msra.mxu0 0
    %106 = vmatprep.subr.bf16.mxu0 0
    %107 = vmatpush1.bf16.msra.mxu0 0
    %108 = vmatprep.subr.bf16.mxu0 0
    %109 = vmatpush1.bf16.msra.mxu0 0
    %110 = vmatprep.subr.bf16.mxu0 0
    %111 = vmatpush1.bf16.msra.mxu0 0
    %112 = vmatprep.subr.bf16.mxu0 0
    %113 = vmatpush1.bf16.msra.mxu0 0
    %114 = vmatprep.subr.bf16.mxu0 0
    %115 = vmatpush1.bf16.msra.mxu0 %v91
    %116 = vmatprep.subr.bf16.mxu0 0
    %117 = vmatpush2.bf16.msra.mxu0 0
    %118 = vmatprep.subr.bf16.mxu0 0
    %119 = vmatpush2.bf16.msra.mxu0 0
    %120 = vmatprep.subr.bf16.mxu0 0
    %121 = vmatpush2.bf16.msra.mxu0 0
    %122 = vmatprep.subr.bf16.mxu0 0
    %123 = vmatpush2.bf16.msra.mxu0 0
    %124 = vmatprep.subr.bf16.mxu0 0
    %125 = vmatpush2.bf16.msra.mxu0 0
    %126 = vmatprep.subr.bf16.mxu0 0
    %127 = vmatpush2.bf16.msra.mxu0 0
    %128 = vmatprep.subr.bf16.mxu0 0
    %129 = vmatpush2.bf16.msra.mxu0 0
    %130 = vmatprep.subr.bf16.mxu0 0
    %131 = vmatpush2.bf16.msra.mxu0 0
    %132 = vmatprep.mubr.bf16.mxu0 0
    %133 = vmatmul.mubr.bf16.gmra.mxu0 %v95
    %v134 = vpop.f32.mrf.mxu0
    %v135 = vadd.f32 %v60, %v134
    %v136 = vpop.f32.mrf.mxu0
    %v137 = vpop.f32.mrf.mxu0
    %v138 = vadd.f32 %v65, %v137
    %v139 = vpop.f32.mrf.mxu0
    %140 = vmatprep.mubr.bf16.mxu0 0
    %141 = vmatmul.mubr.bf16.gmra.mxu0 %v98
    %v142 = vpop.f32.mrf.mxu0
    %v143 = vadd.f32 %v70, %v142
    %v144 = vpop.f32.mrf.mxu0
    %v145 = vpop.f32.mrf.mxu0
    %v146 = vadd.f32 %v75, %v145
    %v147 = vpop.f32.mrf.mxu0
    %148 = vdwg.mxu0
    %v149 = vmax.f32 %v135, 0.0
    %v150 = vmax.f32 %v138, 0.0
    %v151 = vmax.f32 %v143, 0.0
    %v152 = vmax.f32 %v146, 0.0
    %v153 = vpack.c.bf16 %v150, %v149
    %v154 = vpack.c.bf16 %v152, %v151
    %156 = vset.pattern.permute.xlu0 0
    %157 = vperm.xlu0 %156, %v41
    %v158 = vpop.permute.xlu0 %157
    %161 = vset.pattern.permute.xlu0 0
    %162 = vperm.xlu0 %161, %v42
    %v163 = vpop.permute.xlu0 %162
    %166 = vset.pattern.permute.xlu0 0
    %167 = vperm.xlu0 %166, %v43
    %v168 = vpop.permute.xlu0 %167
    %171 = vset.pattern.permute.xlu0 0
    %172 = vperm.xlu0 %171, %v44
    %v173 = vpop.permute.xlu0 %172
    %v179 = vunpack.c.l.b16 %v20
    %v180 = vunpack.c.l.b16 %v21
    %v181 = vunpack.c.l.b16 %v22
    %v182 = vunpack.c.l.b16 %v23
    %v183 = vpack.c.b16 %v180, %v179
    %v184 = vpack.c.b16 %v182, %v181
    %vm185 = vcmask 261120
    %v187 = vsel %vm185, %v183, 0
    %v190 = vsel %vm185, %v184, 0
    %192 = vmatprep.subr.bf16.mxu0 0
    %193 = vmatpush1.bf16.msra.mxu0 0
    %194 = vmatprep.subr.bf16.mxu0 0
    %195 = vmatpush1.bf16.msra.mxu0 0
    %196 = vmatprep.subr.bf16.mxu0 0
    %197 = vmatpush1.bf16.msra.mxu0 0
    %198 = vmatprep.subr.bf16.mxu0 0
    %199 = vmatpush1.bf16.msra.mxu0 0
    %200 = vmatprep.subr.bf16.mxu0 0
    %201 = vmatpush1.bf16.msra.mxu0 0
    %202 = vmatprep.subr.bf16.mxu0 0
    %203 = vmatpush1.bf16.msra.mxu0 0
    %204 = vmatprep.subr.bf16.mxu0 0
    %205 = vmatpush1.bf16.msra.mxu0 %v154
    %206 = vmatprep.subr.bf16.mxu0 0
    %207 = vmatpush1.bf16.msra.mxu0 %v153
    %208 = vmatprep.subr.bf16.mxu0 0
    %209 = vmatpush2.bf16.msra.mxu0 0
    %210 = vmatprep.subr.bf16.mxu0 0
    %211 = vmatpush2.bf16.msra.mxu0 0
    %212 = vmatprep.subr.bf16.mxu0 0
    %213 = vmatpush2.bf16.msra.mxu0 0
    %214 = vmatprep.subr.bf16.mxu0 0
    %215 = vmatpush2.bf16.msra.mxu0 0
    %216 = vmatprep.subr.bf16.mxu0 0
    %217 = vmatpush2.bf16.msra.mxu0 0
    %218 = vmatprep.subr.bf16.mxu0 0
    %219 = vmatpush2.bf16.msra.mxu0 0
    %220 = vmatprep.subr.bf16.mxu0 0
    %221 = vmatpush2.bf16.msra.mxu0 0
    %222 = vmatprep.subr.bf16.mxu0 0
    %223 = vmatpush2.bf16.msra.mxu0 0
    %224 = vmatprep.mubr.bf16.mxu0 0
    %225 = vmatmul.mubr.bf16.gmra.mxu0 %v187
    %v226 = vpop.f32.mrf.mxu0
    %v227 = vadd.f32 %v158, %v226
    %v228 = vpop.f32.mrf.mxu0
    %v229 = vpop.f32.mrf.mxu0
    %v230 = vadd.f32 %v163, %v229
    %v231 = vpop.f32.mrf.mxu0
    %232 = vmatprep.mubr.bf16.mxu0 0
    %233 = vmatmul.mubr.bf16.gmra.mxu0 %v190
    %v234 = vpop.f32.mrf.mxu0
    %v235 = vadd.f32 %v168, %v234
    %v236 = vpop.f32.mrf.mxu0
    %v237 = vpop.f32.mrf.mxu0
    %v238 = vadd.f32 %v173, %v237
    %v239 = vpop.f32.mrf.mxu0
    %240 = vdwg.mxu0
    %v241 = vmax.f32 %v227, 0.0
    %v242 = vmax.f32 %v230, 0.0
    %v243 = vmax.f32 %v235, 0.0
    %v244 = vmax.f32 %v238, 0.0
    %v245 = vpack.c.bf16 %v242, %v241
    %v246 = vpack.c.bf16 %v244, %v243
    %248 = vset.pattern.permute.xlu0 0
    %249 = vperm.xlu0 %248, %v49
    %v250 = vpop.permute.xlu0 %249
    %253 = vset.pattern.permute.xlu0 0
    %254 = vperm.xlu0 %253, %v50
    %v255 = vpop.permute.xlu0 %254
    %258 = vset.pattern.permute.xlu0 0
    %259 = vperm.xlu0 %258, %v51
    %v260 = vpop.permute.xlu0 %259
    %263 = vset.pattern.permute.xlu0 0
    %264 = vperm.xlu0 %263, %v52
    %v265 = vpop.permute.xlu0 %264
    %v271 = vunpack.c.l.b16 %v24
    %v272 = vunpack.c.l.b16 %v25
    %v273 = vunpack.c.l.b16 %v26
    %v274 = vunpack.c.l.b16 %v27
    %v275 = vpack.c.b16 %v272, %v271
    %v276 = vpack.c.b16 %v274, %v273
    %v278 = vsel %vm185, %v275, 0
    %v281 = vsel %vm185, %v276, 0
    %283 = vmatprep.subr.bf16.mxu0 0
    %284 = vmatpush1.bf16.msra.mxu0 0
    %285 = vmatprep.subr.bf16.mxu0 0
    %286 = vmatpush1.bf16.msra.mxu0 0
    %287 = vmatprep.subr.bf16.mxu0 0
    %288 = vmatpush1.bf16.msra.mxu0 0
    %289 = vmatprep.subr.bf16.mxu0 0
    %290 = vmatpush1.bf16.msra.mxu0 0
    %291 = vmatprep.subr.bf16.mxu0 0
    %292 = vmatpush1.bf16.msra.mxu0 0
    %293 = vmatprep.subr.bf16.mxu0 0
    %294 = vmatpush1.bf16.msra.mxu0 0
    %295 = vmatprep.subr.bf16.mxu0 0
    %296 = vmatpush1.bf16.msra.mxu0 %v246
    %297 = vmatprep.subr.bf16.mxu0 0
    %298 = vmatpush1.bf16.msra.mxu0 %v245
    %299 = vmatprep.subr.bf16.mxu0 0
    %300 = vmatpush2.bf16.msra.mxu0 0
    %301 = vmatprep.subr.bf16.mxu0 0
    %302 = vmatpush2.bf16.msra.mxu0 0
    %303 = vmatprep.subr.bf16.mxu0 0
    %304 = vmatpush2.bf16.msra.mxu0 0
    %305 = vmatprep.subr.bf16.mxu0 0
    %306 = vmatpush2.bf16.msra.mxu0 0
    %307 = vmatprep.subr.bf16.mxu0 0
    %308 = vmatpush2.bf16.msra.mxu0 0
    %309 = vmatprep.subr.bf16.mxu0 0
    %310 = vmatpush2.bf16.msra.mxu0 0
    %311 = vmatprep.subr.bf16.mxu0 0
    %312 = vmatpush2.bf16.msra.mxu0 0
    %313 = vmatprep.subr.bf16.mxu0 0
    %314 = vmatpush2.bf16.msra.mxu0 0
    %315 = vmatprep.mubr.bf16.mxu0 0
    %316 = vmatmul.mubr.bf16.gmra.mxu0 %v278
    %v317 = vpop.f32.mrf.mxu0
    %v318 = vadd.f32 %v250, %v317
    %v319 = vpop.f32.mrf.mxu0
    %v320 = vpop.f32.mrf.mxu0
    %v321 = vadd.f32 %v255, %v320
    %v322 = vpop.f32.mrf.mxu0
    %323 = vmatprep.mubr.bf16.mxu0 0
    %324 = vmatmul.mubr.bf16.gmra.mxu0 %v281
    %v325 = vpop.f32.mrf.mxu0
    %v326 = vadd.f32 %v260, %v325
    %v327 = vpop.f32.mrf.mxu0
    %v328 = vpop.f32.mrf.mxu0
    %v329 = vadd.f32 %v265, %v328
    %v330 = vpop.f32.mrf.mxu0
    %331 = vdwg.mxu0
    %v332 = vmax.f32 %v318, 0.0
    %v333 = vmax.f32 %v321, 0.0
    %v334 = vmax.f32 %v326, 0.0
    %v335 = vmax.f32 %v329, 0.0
    %v336 = vpack.c.bf16 %v333, %v332
    %v337 = vpack.c.bf16 %v335, %v334
    %339 = vset.pattern.permute.xlu0 0
    %340 = vperm.xlu0 %339, %v54
    %v341 = vpop.permute.xlu0 %340
    %v344 = vsel %vm185, %v28, 0
    %346 = vmatprep.subr.bf16.mxu0 0
    %347 = vmatpush1.bf16.msra.mxu0 0
    %348 = vmatprep.subr.bf16.mxu0 0
    %349 = vmatpush1.bf16.msra.mxu0 0
    %350 = vmatprep.subr.bf16.mxu0 0
    %351 = vmatpush1.bf16.msra.mxu0 0
    %352 = vmatprep.subr.bf16.mxu0 0
    %353 = vmatpush1.bf16.msra.mxu0 0
    %354 = vmatprep.subr.bf16.mxu0 0
    %355 = vmatpush1.bf16.msra.mxu0 0
    %356 = vmatprep.subr.bf16.mxu0 0
    %357 = vmatpush1.bf16.msra.mxu0 0
    %358 = vmatprep.subr.bf16.mxu0 0
    %359 = vmatpush1.bf16.msra.mxu0 %v337
    %360 = vmatprep.subr.bf16.mxu0 0
    %361 = vmatpush1.bf16.msra.mxu0 %v336
    %362 = vmatprep.subr.bf16.mxu0 0
    %363 = vmatpush2.bf16.msra.mxu0 0
    %364 = vmatprep.subr.bf16.mxu0 0
    %365 = vmatpush2.bf16.msra.mxu0 0
    %366 = vmatprep.subr.bf16.mxu0 0
    %367 = vmatpush2.bf16.msra.mxu0 0
    %368 = vmatprep.subr.bf16.mxu0 0
    %369 = vmatpush2.bf16.msra.mxu0 0
    %370 = vmatprep.subr.bf16.mxu0 0
    %371 = vmatpush2.bf16.msra.mxu0 0
    %372 = vmatprep.subr.bf16.mxu0 0
    %373 = vmatpush2.bf16.msra.mxu0 0
    %374 = vmatprep.subr.bf16.mxu0 0
    %375 = vmatpush2.bf16.msra.mxu0 0
    %376 = vmatprep.subr.bf16.mxu0 0
    %377 = vmatpush2.bf16.msra.mxu0 0
    %378 = vmatprep.mubr.bf16.mxu0 0
    %379 = vmatmul.mubr.bf16.gmra.mxu0 %v344
    %v380 = vpop.f32.mrf.mxu0
    %v381 = vadd.f32 %v341, %v380
    %v382 = vpop.f32.mrf.mxu0
    %v383 = vpop.f32.mrf.mxu0
    %v384 = vpop.f32.mrf.mxu0
    %385 = vdwg.mxu0
    %v386 = vmax.f32 %v381, -20.0
    %v387 = vmin.f32 %v386, 2.0
    %v388 = vld [vmem:[%s2] sm:$0xf]
    %v389 = vmul.f32 %v387, 1.442695
    %v390 = vpow.pop %v389
    %v392 = vrot.slane %v388, 4
    %v394 = vmul.f32 %v390, %v392
    %v396 = vrot.slane %v394, 4
    %v398 = vadd.f32 %v381, %v396
    %v399 = vtanh.pop %v398
    %v400 = vtanh.pop %v381
    %401 = vst [vmem:[#allocation2] sm:$0xf] %v399
    %402 = vst [vmem:[#allocation2 + $0x4] sm:$0xf] %v400
    %v403 = vmul.f32 %v388, -0.5
    %v404 = vmul.f32 %v403, %v388
    %v406 = vrot.slane %v387, 4
    %v408 = vsub.f32 %v404, %v406
    %v409 = vsub.f32 %v408, 0.9189385
    %v410 = vsub.f32 0.6931472, %v398
    %v411 = vmul.f32 %v398, -2.0
    %v412 = vmax.f32 %v411, 0.0
    %vm413 = vcmp.ne.f32.partialorder %v411, %v411
    %v414 = vadd.f32 %v411, 0.0
    %v415 = vand.u32 2147483647, %v411
    %v416 = vsub.f32 0.0, %v415
    %v417 = vmul.f32 %v416, 1.442695
    %v418 = vpow.pop %v417
    %v419 = vadd.f32 %v418, 1.0
    %v420 = vlog2.pop %v419
    %v421 = vmul.f32 %v420, 0.6931472
    %v422 = vmul.f32 -0.5, %v418
    %v423 = vadd.f32 %v422, 1.0
    %v424 = vmul.f32 %v423, %v418
    %v425 = vand.u32 2147483647, %v418
    %vm426 = vcmp.lt.f32.partialorder %v425, 0.0004427343
    %v427 = vsel %vm426, %v424, %v421
    %v428 = vadd.f32 %v412, %v427
    %v429 = vsel %vm413, %v414, %v428
    %v430 = vsub.f32 %v410, %v429
    %v431 = vmul.f32 %v430, 2.0
    %v432 = vsub.f32 %v409, %v431
    %vm433 = vcmask 1043456
    %v434 = vsel %vm433, %v432, 0.0
    %v435 = vrot.slane %v434, 4
    %v436 = vadd.f32 %v434, %v435
    %v437 = vrot.slane %v436, 2
    %v438 = vadd.f32 %v436, %v437
    %v439 = vrot.slane %v438, 1
    %v440 = vadd.f32 %v438, %v439
    %441 = vst [vmem:[#allocation2 + $0x8] sm:$0x1] %v440
    // Predicated region
    $region14: #{tpu_custom_call.1} parent=1 // pred_check
      _
    $region15: #{tpu_custom_call.1} parent=1 // pred_check_branch
      %443 = sbr.rel (0) target = $region17
    $region16: #{tpu_custom_call.1} parent=1 // pred_region
      %s445 = ssub.s32 256, 256
      %446 = vsyncadd [#allocation3], %s445
      %s447 = sshll.u32 [#allocation2], 4
      %s448 = int_to_ptr.vmem [resolvable:$true] %s447
      %453 = dma.vmem_to_hbm [thread:$0]  %s448, 256, %s3, [#allocation3], 128, 128, 8
    $region17: #{tpu_custom_call.1} parent=1 // pred_fallthru
      _
    // Predicated region
    $region18: #{tpu_custom_call.1} parent=1 // pred_check
      _
    $region19: #{tpu_custom_call.1} parent=1 // pred_check_branch
      %455 = sbr.rel (0) target = $region21
    $region20: #{tpu_custom_call.1} parent=1 // pred_region
      %456 = dma.done [#allocation3], 256
    $region21: #{tpu_custom_call.1} parent=1 // pred_fallthru
      _
    %457 = vsyncpa [#allocation3], 1

</llo_original>
